<compile_context>
chip_gen: v6e
topology: v6e:2x2x1
jax: 0.10.0
libtpu: 0.0.40
codegen_flags: <defaults>
</compile_context>

<pallas_src>
import jax
import jax.numpy as jnp
from jax.experimental import pallas as pl
from jax.experimental.pallas import tpu as pltpu


_VMEM_LIMIT = 48 * 1024 * 1024  # safe on v5e/v6e (128 MiB) and v7x (64 MiB)


def _round_up(x, m):
    return ((x + m - 1) // m) * m


# ----------------------------------------------------------------------------
# One-shot weight standardization kernel (f32 stats -> bf16 standardized W)
# ----------------------------------------------------------------------------
def _wstd_kernel(w_ref, o_ref):
    w = w_ref[...]                                            # (K, O_pad) f32
    m = jnp.mean(w, axis=0, keepdims=True)
    v = jnp.mean((w - m) ** 2, axis=0, keepdims=True)         # unbiased=False
    o_ref[...] = ((w - m) * jax.lax.rsqrt(v + 1e-5)).astype(jnp.bfloat16)


def _standardize_weight(wm_f32):
    K, O_pad = wm_f32.shape
    return pl.pallas_call(
        _wstd_kernel,
        out_shape=jax.ShapeDtypeStruct((K, O_pad), jnp.bfloat16),
        grid=(1,),
        in_specs=[pl.BlockSpec((K, O_pad), lambda i: (0, 0))],
        out_specs=pl.BlockSpec((K, O_pad), lambda i: (0, 0)),
        compiler_params=pltpu.CompilerParams(
            dimension_semantics=("arbitrary",),
            vmem_limit_bytes=_VMEM_LIMIT),
    )(wm_f32)


# ----------------------------------------------------------------------------
# Plain matmul kernel (bf16 x bf16 -> f32 accumulate -> bf16 store)
# ----------------------------------------------------------------------------
def _matmul_kernel(a_ref, w_ref, o_ref):
    o_ref[...] = jnp.dot(a_ref[...], w_ref[...],
                         preferred_element_type=jnp.float32).astype(o_ref.dtype)


def _pick_tm(M):
    if M <= 256:
        return M                    # single full-extent tile
    if M <= 1024:
        return _round_up((M + 1) // 2, 8)   # 2 tiles -> both TCs busy on v7x
    return 512


def _matmul(a_bf16, w_std_bf16):
    # a: (M, K) bf16 activations/patches, w: (K, O_pad) bf16 standardized.
    M, K = a_bf16.shape
    _, O_pad = w_std_bf16.shape
    tm = _pick_tm(M)
    grid = (pl.cdiv(M, tm),)
    return pl.pallas_call(
        _matmul_kernel,
        out_shape=jax.ShapeDtypeStruct((M, O_pad), jnp.bfloat16),
        grid=grid,
        in_specs=[
            pl.BlockSpec((tm, K), lambda i: (i, 0)),
            pl.BlockSpec((K, O_pad), lambda i: (0, 0)),       # resident weight
        ],
        out_specs=pl.BlockSpec((tm, O_pad), lambda i: (i, 0)),
        compiler_params=pltpu.CompilerParams(
            dimension_semantics=("parallel",),
            vmem_limit_bytes=_VMEM_LIMIT),
    )(a_bf16, w_std_bf16)


# ----------------------------------------------------------------------------
# Direct 3x3 conv kernel (no im2col): grid=(N, OH), tap rows via index_map,
# tap columns via static slices (stride 1) or an exact 0/1 selection matmul
# (stride 2).  Accumulates 9 taps in f32, stores bf16.
# ----------------------------------------------------------------------------
def _make_conv3x3_kernel(stride, OW, C):
    def kernel(*refs):
        if stride == 1:
            r0, r1, r2, w_ref, o_ref = refs
            sel_ref = None
        else:
            r0, r1, r2, w_ref, sel_ref, o_ref = refs
        rows = (r0, r1, r2)
        acc = None
        for dy in range(3):
            row = rows[dy][0].astype(jnp.float32)             # (Wp, C)
            for dx in range(3):
                if stride == 1:
                    a = row[dx:dx + OW, :]                    # static slice
                else:
                    a = jnp.dot(sel_ref[dx], row,
                                preferred_element_type=jnp.float32)
                wk = w_ref[pl.ds((3 * dy + dx) * C, C), :]    # (C, O_pad) bf16
                p = jnp.dot(a.astype(jnp.bfloat16), wk,
                            preferred_element_type=jnp.float32)
                acc = p if acc is None else acc + p
        o_ref[0] = acc.astype(o_ref.dtype)
    return kernel


def _conv3x3_direct(x, w_std, stride):
    # x: (N, H, W, C) bf16; w_std: (9*C, O_pad) bf16; padding == 1.
    N, H, W, C = x.shape
    K, O_pad = w_std.shape
    assert K == 9 * C
    xp = jnp.pad(x, ((0, 0), (1, 1), (1, 1), (0, 0)))
    Hp, Wp = H + 2, W + 2
    OH = (Hp - 3) // stride + 1
    OW = (Wp - 3) // stride + 1
    xr = xp.reshape(N * Hp, Wp, C)

    inputs = [xr, xr, xr]
    in_specs = [
        pl.BlockSpec((1, Wp, C),
                     lambda n, oh, d=dy, s=stride, hp=Hp: (n * hp + oh * s + d, 0, 0))
        for dy in range(3)
    ]
    inputs.append(w_std)
    in_specs.append(pl.BlockSpec((K, O_pad), lambda n, oh: (0, 0)))
    if stride != 1:
        j = jnp.arange(Wp)[None, None, :]
        i = jnp.arange(OW)[None, :, None]
        dxs = jnp.arange(3)[:, None, None]
        sel = (j == i * stride + dxs).astype(jnp.float32)     # (3, OW, Wp) 0/1
        inputs.append(sel)
        in_specs.append(pl.BlockSpec((3, OW, Wp), lambda n, oh: (0, 0, 0)))

    out = pl.pallas_call(
        _make_conv3x3_kernel(stride, OW, C),
        out_shape=jax.ShapeDtypeStruct((N * OH, OW, O_pad), jnp.bfloat16),
        grid=(N, OH),
        in_specs=in_specs,
        out_specs=pl.BlockSpec((1, OW, O_pad),
                               lambda n, oh, o=OH: (n * o + oh, 0, 0)),
        compiler_params=pltpu.CompilerParams(
            dimension_semantics=("parallel", "parallel"),
            vmem_limit_bytes=_VMEM_LIMIT),
    )(*inputs)
    return out.reshape(N, OH, OW, O_pad)


# ----------------------------------------------------------------------------
# im2col fallback (only used for the 7x7 stride-2 root conv; 3 input channels)
# ----------------------------------------------------------------------------
def _extract_patches_nhwc(x, kh, kw, stride, padding):
    N, H, W, C = x.shape
    if padding > 0:
        x = jnp.pad(x, ((0, 0), (padding, padding), (padding, padding), (0, 0)))
    Hp, Wp = H + 2 * padding, W + 2 * padding
    OH = (Hp - kh) // stride + 1
    OW = (Wp - kw) // stride + 1
    taps = []
    for dy in range(kh):
        for dx in range(kw):
            taps.append(x[:, dy:dy + stride * (OH - 1) + 1:stride,
                          dx:dx + stride * (OW - 1) + 1:stride, :])
    p = jnp.concatenate(taps, axis=-1)                        # (N, OH, OW, kh*kw*C)
    return p.reshape(N * OH * OW, kh * kw * C), OH, OW


def std_conv2d(x, w, stride, padding):
    # x: (N, H, W, C) NHWC bf16;  w: (O, I, kh, kw) OIHW f32 (raw).
    O, I, kh, kw = w.shape
    N = x.shape[0]
    K = I * kh * kw
    O_pad = _round_up(O, 128)
    wm = jnp.transpose(w, (2, 3, 1, 0)).reshape(K, O).astype(jnp.float32)
    if O_pad != O:
        wm = jnp.pad(wm, ((0, 0), (0, O_pad - O)))            # zero cols -> zero out
    w_std = _standardize_weight(wm)                           # (K, O_pad) bf16

    if kh == 1 and kw == 1:
        xs = x[:, ::stride, ::stride, :] if stride > 1 else x
        _, OH, OW, _ = xs.shape
        out = _matmul(xs.reshape(N * OH * OW, I), w_std)
        out = out.reshape(N, OH, OW, O_pad)
    elif kh == 3 and kw == 3 and padding == 1:
        out = _conv3x3_direct(x, w_std, stride)
    else:
        a, OH, OW = _extract_patches_nhwc(x, kh, kw, stride, padding)
        out = _matmul(a, w_std).reshape(N, OH, OW, O_pad)
    if O_pad != O:
        out = out[..., :O]
    return out


# ----------------------------------------------------------------------------
# GroupNorm kernel (f32 stats from column sums, optional fused add + ReLU)
# ----------------------------------------------------------------------------
def _make_gn_kernel(eps, inv_cnt, relu, has_residual, per_channel):
    def kernel(*refs):
        if per_channel:
            x_ref, w_ref, b_ref = refs[:3]
            nxt = 3
        else:
            x_ref, p_ref, w_ref, b_ref = refs[:4]
            nxt = 4
        res_ref = refs[nxt] if has_residual else None
        o_ref = refs[-1]

        x = x_ref[0].astype(jnp.float32)                      # (HW, C)
        if per_channel:                                       # one channel / group
            mean_c = jnp.mean(x, axis=0, keepdims=True)
            d = x - mean_c
            var_c = jnp.mean(d * d, axis=0, keepdims=True)
        else:
            p = p_ref[...]                                    # (C, C) group proj
            sum_c = jnp.sum(x, axis=0, keepdims=True)         # (1, C)
            mean_c = jnp.dot(sum_c, p,
                             preferred_element_type=jnp.float32) * inv_cnt
            d = x - mean_c
            ss_c = jnp.sum(d * d, axis=0, keepdims=True)
            var_c = jnp.dot(ss_c, p,
                            preferred_element_type=jnp.float32) * inv_cnt
        y = d * jax.lax.rsqrt(var_c + eps) * w_ref[...] + b_ref[...]
        if has_residual:
            y = y + res_ref[0].astype(jnp.float32)
        if relu:
            y = jnp.maximum(y, 0.0)
        o_ref[0] = y.astype(o_ref.dtype)
    return kernel


def group_norm(x, weight, bias, num_groups, eps, relu=False, residual=None):
    # x (and optional residual): (N, H, W, C) NHWC bf16.
    # Computes relu(residual + GN(x)) when residual is given; output bf16.
    N, H, W, C = x.shape
    G = num_groups
    Cg = C // G
    HW = H * W
    per_channel = (Cg == 1)
    has_res = residual is not None

    xr = x.reshape(N, HW, C)
    w2 = weight.reshape(1, C).astype(jnp.float32)
    b2 = bias.reshape(1, C).astype(jnp.float32)

    inputs = [xr]
    in_specs = [pl.BlockSpec((1, HW, C), lambda n: (n, 0, 0))]
    if not per_channel:
        gid = jnp.arange(C) // Cg
        proj = (gid[:, None] == gid[None, :]).astype(jnp.float32)   # (C, C)
        inputs.append(proj)
        in_specs.append(pl.BlockSpec((C, C), lambda n: (0, 0)))
    inputs += [w2, b2]
    in_specs += [pl.BlockSpec((1, C), lambda n: (0, 0)),
                 pl.BlockSpec((1, C), lambda n: (0, 0))]
    if has_res:
        inputs.append(residual.reshape(N, HW, C))
        in_specs.append(pl.BlockSpec((1, HW, C), lambda n: (n, 0, 0)))

    kernel = _make_gn_kernel(float(eps), 1.0 / float(HW * Cg), relu, has_res,
                             per_channel)
    out = pl.pallas_call(
        kernel,
        out_shape=jax.ShapeDtypeStruct((N, HW, C), jnp.bfloat16),
        grid=(N,),
        in_specs=in_specs,
        out_specs=pl.BlockSpec((1, HW, C), lambda n: (n, 0, 0)),
        compiler_params=pltpu.CompilerParams(
            dimension_semantics=("parallel",),
            vmem_limit_bytes=_VMEM_LIMIT),
    )(*inputs)
    return out.reshape(N, H, W, C)


# ----------------------------------------------------------------------------
# MaxPool2d(kernel_size=3, stride=2, padding=0): single-read input, grid=(N,OH)
# ----------------------------------------------------------------------------
def _maxpool_kernel(r0, r1, r2, sel_ref, o_ref):
    m = jnp.maximum(jnp.maximum(r0[0], r1[0]), r2[0]).astype(jnp.float32)  # (W, C)
    out = jnp.dot(sel_ref[0], m, preferred_element_type=jnp.float32)
    out = jnp.maximum(out, jnp.dot(sel_ref[1], m,
                                   preferred_element_type=jnp.float32))
    out = jnp.maximum(out, jnp.dot(sel_ref[2], m,
                                   preferred_element_type=jnp.float32))
    o_ref[0] = out.astype(o_ref.dtype)


def max_pool_3x3_s2(x):
    N, H, W, C = x.shape
    OH = (H - 3) // 2 + 1
    OW = (W - 3) // 2 + 1
    xr = x.reshape(N * H, W, C)
    j = jnp.arange(W)[None, None, :]
    i = jnp.arange(OW)[None, :, None]
    dxs = jnp.arange(3)[:, None, None]
    sel = (j == 2 * i + dxs).astype(jnp.float32)              # (3, OW, W) 0/1
    in_specs = [
        pl.BlockSpec((1, W, C),
                     lambda n, oh, d=dy, h=H: (n * h + 2 * oh + d, 0, 0))
        for dy in range(3)
    ]
    in_specs.append(pl.BlockSpec((3, OW, W), lambda n, oh: (0, 0, 0)))
    out = pl.pallas_call(
        _maxpool_kernel,
        out_shape=jax.ShapeDtypeStruct((N * OH, OW, C), jnp.bfloat16),
        grid=(N, OH),
        in_specs=in_specs,
        out_specs=pl.BlockSpec((1, OW, C), lambda n, oh, o=OH: (n * o + oh, 0, 0)),
        compiler_params=pltpu.CompilerParams(
            dimension_semantics=("parallel", "parallel"),
            vmem_limit_bytes=_VMEM_LIMIT),
    )(xr, xr, xr, sel)
    return out.reshape(N, OH, OW, C)


# ----------------------------------------------------------------------------
# ResNetV2 model
# ----------------------------------------------------------------------------
def _randn(key, shape, scale=0.05):
    return scale * jax.random.normal(key, shape, dtype=jnp.float32)


def init_params(key, block_units, width_factor):
    width = int(64 * width_factor)
    keys = iter(jax.random.split(key, 1024))
    params = {
        "root_conv": _randn(next(keys), (width, 3, 7, 7)),
        "root_gn_w": 1.0 + _randn(next(keys), (width,), 0.1),
        "root_gn_b": _randn(next(keys), (width,), 0.1),
    }
    cfgs = [
        (width, width * 4, width, 1),           # block1
        (width * 4, width * 8, width * 2, 2),   # block2
        (width * 8, width * 16, width * 4, 2),  # block3
    ]
    body = []
    for bi, (cin0, cout, cmid, stride0) in enumerate(cfgs):
        units = []
        for ui in range(block_units[bi]):
            cin = cin0 if ui == 0 else cout
            stride = stride0 if ui == 0 else 1
            p = {
                "conv1": _randn(next(keys), (cmid, cin, 1, 1)),
                "gn1_w": 1.0 + _randn(next(keys), (cmid,), 0.1),
                "gn1_b": _randn(next(keys), (cmid,), 0.1),
                "conv2": _randn(next(keys), (cmid, cmid, 3, 3)),
                "gn2_w": 1.0 + _randn(next(keys), (cmid,), 0.1),
                "gn2_b": _randn(next(keys), (cmid,), 0.1),
                "conv3": _randn(next(keys), (cout, cmid, 1, 1)),
                "gn3_w": 1.0 + _randn(next(keys), (cout,), 0.1),
                "gn3_b": _randn(next(keys), (cout,), 0.1),
            }
            if stride != 1 or cin != cout:
                p["downsample"] = _randn(next(keys), (cout, cin, 1, 1))
                p["gn_proj_w"] = 1.0 + _randn(next(keys), (cout,), 0.1)
                p["gn_proj_b"] = _randn(next(keys), (cout,), 0.1)
            units.append((p, stride))
        body.append(units)
    params["body"] = body
    return params, width


def bottleneck_forward(x, p, stride):
    # x: NHWC bf16
    if "downsample" in p:
        residual = std_conv2d(x, p["downsample"], stride=stride, padding=0)
        cout = p["downsample"].shape[0]
        # gn_proj = GroupNorm(cout, cout), default eps=1e-5, no ReLU
        residual = group_norm(residual, p["gn_proj_w"], p["gn_proj_b"],
                              num_groups=cout, eps=1e-5, relu=False)
    else:
        residual = x
    y = std_conv2d(x, p["conv1"], stride=1, padding=0)
    y = group_norm(y, p["gn1_w"], p["gn1_b"], 32, 1e-6, relu=True)
    y = std_conv2d(y, p["conv2"], stride=stride, padding=1)
    y = group_norm(y, p["gn2_w"], p["gn2_b"], 32, 1e-6, relu=True)
    y = std_conv2d(y, p["conv3"], stride=1, padding=0)
    # gn3 + residual add + ReLU fused in one kernel
    y = group_norm(y, p["gn3_w"], p["gn3_b"], 32, 1e-6,
                   relu=True, residual=residual)
    return y


def resnetv2_forward(x_nchw, params):
    features = []
    b, c, in_size, _ = x_nchw.shape
    x = jnp.transpose(x_nchw, (0, 2, 3, 1)).astype(jnp.bfloat16)   # NHWC bf16
    # root: StdConv2d(3, width, 7, stride=2, pad=3) -> GN(32, eps=1e-6) -> ReLU
    x = std_conv2d(x, params["root_conv"], stride=2, padding=3)
    x = group_norm(x, params["root_gn_w"], params["root_gn_b"],
                   32, 1e-6, relu=True)
    features.append(jnp.transpose(x, (0, 3, 1, 2)).astype(jnp.float32))
    x = max_pool_3x3_s2(x)
    body = params["body"]
    for i in range(len(body) - 1):
        for (unit_p, stride) in body[i]:
            x = bottleneck_forward(x, unit_p, stride)
        right_size = int(in_size / 4 / (i + 1))
        x_feat = jnp.transpose(x, (0, 3, 1, 2)).astype(jnp.float32)
        if x.shape[1] != right_size:
            pad = right_size - x.shape[1]
            assert 0 < pad < 3, "x {} should {}".format(x.shape, right_size)
            feat = jnp.zeros((b, x.shape[3], right_size, right_size),
                             dtype=jnp.float32)
            feat = feat.at[:, :, 0:x.shape[1], 0:x.shape[2]].set(x_feat)
        else:
            feat = x_feat
        features.append(feat)
    for (unit_p, stride) in body[-1]:
        x = bottleneck_forward(x, unit_p, stride)
    return jnp.transpose(x, (0, 3, 1, 2)).astype(jnp.float32), features[::-1]


if __name__ == "__main__":
    key = jax.random.PRNGKey(0)
    block_units = (1, 1, 1)     # one PreActBottleneck unit per block
    width_factor = 0.5          # width = 32 (keeps GroupNorm(32, .) valid)
    params, width = init_params(key, block_units, width_factor)

    x = jax.random.normal(jax.random.fold_in(key, 999),
                          (2, 3, 32, 32), dtype=jnp.float32)

    out, feats = resnetv2_forward(x, params)
    out = jax.block_until_ready(out)
    feats = [jax.block_until_ready(f) for f in feats]

    # basic shape sanity checks (mirror the PyTorch module's semantics)
    assert out.shape == (2, width * 16, 2, 2)
    assert feats[0].shape == (2, width * 8, 4, 4)
    assert feats[1].shape == (2, width * 4, 8, 8)
    assert feats[2].shape == (2, width, 16, 16)
    assert bool(jnp.isfinite(out).all())

    print("KERNEL_OK")
</pallas_src>

<mosaic_0001>
module attributes {stable_mosaic.version = 11 : i64} {
  func.func @_wstd_kernel(%arg0: i32, %arg1: memref<147x128xf32, #tpu.memory_space<vmem>>, %arg2: memref<147x128xbf16, #tpu.memory_space<vmem>>) attributes {dimension_semantics = [#tpu.dimension_semantics<arbitrary>], iteration_bounds = array<i64: 1>, scalar_prefetch = 0 : i64, scratch_operands = 0 : i64, tpu.core_type = #tpu.core_type<tc>, window_params = [{pipeline_mode = #tpu.pipeline_mode<synchronous>, transform_indices = @transform_0, window_bounds = array<i64: 147, 128>}, {pipeline_mode = #tpu.pipeline_mode<synchronous>, transform_indices = @transform_1, window_bounds = array<i64: 147, 128>}]} {
    %c0 = arith.constant 0 : index
    %c0_0 = arith.constant 0 : index
    %0 = vector.load %arg1[%c0, %c0_0] : memref<147x128xf32, #tpu.memory_space<vmem>>, vector<147x128xf32>
    %cst = arith.constant dense<0.000000e+00> : vector<128xf32>
    %1 = vector.multi_reduction <add>, %0, %cst [0] : vector<147x128xf32> to vector<128xf32>
    %2 = vector.shape_cast %1 : vector<128xf32> to vector<1x128xf32>
    %cst_1 = arith.constant 1.470000e+02 : f32
    %3 = vector.broadcast %cst_1 : f32 to vector<1x128xf32>
    %4 = arith.divf %2, %3 : vector<1x128xf32>
    %5 = vector.broadcast %4 : vector<1x128xf32> to vector<147x128xf32>
    %6 = arith.subf %0, %5 : vector<147x128xf32>
    %7 = arith.mulf %6, %6 : vector<147x128xf32>
    %cst_2 = arith.constant dense<0.000000e+00> : vector<128xf32>
    %8 = vector.multi_reduction <add>, %7, %cst_2 [0] : vector<147x128xf32> to vector<128xf32>
    %9 = vector.shape_cast %8 : vector<128xf32> to vector<1x128xf32>
    %cst_3 = arith.constant 1.470000e+02 : f32
    %10 = vector.broadcast %cst_3 : f32 to vector<1x128xf32>
    %11 = arith.divf %9, %10 : vector<1x128xf32>
    %12 = vector.broadcast %4 : vector<1x128xf32> to vector<147x128xf32>
    %13 = arith.subf %0, %12 : vector<147x128xf32>
    %cst_4 = arith.constant 9.99999974E-6 : f32
    %14 = vector.broadcast %cst_4 : f32 to vector<1x128xf32>
    %15 = arith.addf %11, %14 : vector<1x128xf32>
    %16 = math.rsqrt %15 : vector<1x128xf32>
    %17 = vector.broadcast %16 : vector<1x128xf32> to vector<147x128xf32>
    %18 = arith.mulf %13, %17 : vector<147x128xf32>
    %19 = arith.truncf %18 : vector<147x128xf32> to vector<147x128xbf16>
    %c0_5 = arith.constant 0 : index
    %c0_6 = arith.constant 0 : index
    %20 = vector.load %arg2[%c0_5, %c0_6] : memref<147x128xbf16, #tpu.memory_space<vmem>>, vector<147x128xbf16>
    tpu.vector_store %arg2[%c0_5, %c0_6], %19 {strides = array<i32>} : memref<147x128xbf16, #tpu.memory_space<vmem>>, vector<147x128xbf16>,
    return
  }
  func.func @transform_0(%arg0: i32) -> (i32, i32) {
    %c0_i32 = arith.constant 0 : i32
    %c0_i32_0 = arith.constant 0 : i32
    %c0_i32_1 = arith.constant 0 : i32
    return %c0_i32, %c0_i32_0 : i32, i32
  }
  func.func @transform_1(%arg0: i32) -> (i32, i32) {
    %c0_i32 = arith.constant 0 : i32
    %c0_i32_0 = arith.constant 0 : i32
    %c0_i32_1 = arith.constant 0 : i32
    return %c0_i32, %c0_i32_0 : i32, i32
  }
}

</mosaic_0001>

<llo_original>
// kernel: tpu_custom_call.1
$region0: #{tpu_custom_call.1}
  #allocation0 [shape = 'u32[]', space=smem, size = 0x4, offset = 0x4, fixed_abs, tag = 'smem constant byte address 0x4 - core index']
  #allocation1 [shape = 'u32[144,128]{1,0:T(1,128)}', space=vmem, size = 0x12000, scoped, tag = 'internal scratch']
  %s0 = inlined_call_operand.hbm [shape: f32[147,128], index: 0, kind: input, shape index: {}]
  %s1 = inlined_call_operand.hbm [shape: bf16[147,128], index: 1, kind: output, shape index: {}]
  %s2 = sld [smem:[#allocation0]]
  $region18: #{tpu_custom_call.1} parent=0
    _
  %s4 = ssub.s32 1, %s2
  %s5 = scalar_select 0, %s4, %s2
  $region1: #{tpu_custom_call.1} parent=0
    #allocation2 [shape = 'u8[77824]{0}', space=vmem, size = 0x13000, scoped, tag = 'input window, operand 0, single buffered']
    #allocation3 [shape = 's32[1]{0}', space=sflag, size = 0x4, scoped, tag = 'scoped memory for tpu_custom_call.1']
    #allocation4 [shape = 's32[1]{0}', space=sflag, size = 0x4, scoped, tag = 'scoped memory for tpu_custom_call.1']
    #allocation5 [shape = 'u8[38912]{0}', space=vmem, size = 0x9800, scoped, tag = 'output window, operand 0, single buffered']
    %6 = vsyncpa [#allocation3], 0
    %7 = vsyncpa [#allocation4], 0
    // Predicated region
    $region2: #{tpu_custom_call.1} parent=1 // pred_check
      _
    $region3: #{tpu_custom_call.1} parent=1 // pred_check_branch
      %9 = sbr.rel (0) target = $region5
    $region4: #{tpu_custom_call.1} parent=1 // pred_region
      %s11 = ssub.s32 2432, 2432
      %12 = vsyncadd [#allocation3], %s11
      %s13 = sshll.u32 [#allocation2], 4
      %s14 = int_to_ptr.vmem [resolvable:$true] %s13
      %19 = dma.hbm_to_vmem [thread:$0]  %s0, 2432, %s14, [#allocation3], 128, 128, 8
    $region5: #{tpu_custom_call.1} parent=1 // pred_fallthru
      _
    // Predicated region
    $region6: #{tpu_custom_call.1} parent=1 // pred_check
      _
    $region7: #{tpu_custom_call.1} parent=1 // pred_check_branch
      %21 = sbr.rel (0) target = $region9
    $region8: #{tpu_custom_call.1} parent=1 // pred_region
      %22 = dma.done [#allocation3], 2432
    $region9: #{tpu_custom_call.1} parent=1 // pred_fallthru
      _
    %v23 = vld [vmem:[#allocation2] sm:$0xff]
    %v24 = vld [vmem:[#allocation2 + $0x8] sm:$0xff]
    %v25 = vld [vmem:[#allocation2 + $0x10] sm:$0xff]
    %v26 = vld [vmem:[#allocation2 + $0x18] sm:$0xff]
    %v27 = vld [vmem:[#allocation2 + $0x20] sm:$0xff]
    %v28 = vld [vmem:[#allocation2 + $0x28] sm:$0xff]
    %v29 = vld [vmem:[#allocation2 + $0x30] sm:$0xff]
    %v30 = vld [vmem:[#allocation2 + $0x38] sm:$0xff]
    %v31 = vld [vmem:[#allocation2 + $0x40] sm:$0xff]
    %v32 = vld [vmem:[#allocation2 + $0x48] sm:$0xff]
    %v33 = vld [vmem:[#allocation2 + $0x50] sm:$0xff]
    %v34 = vld [vmem:[#allocation2 + $0x58] sm:$0xff]
    %v35 = vld [vmem:[#allocation2 + $0x60] sm:$0xff]
    %v36 = vld [vmem:[#allocation2 + $0x68] sm:$0xff]
    %v37 = vld [vmem:[#allocation2 + $0x70] sm:$0xff]
    %v38 = vld [vmem:[#allocation2 + $0x78] sm:$0xff]
    %v39 = vld [vmem:[#allocation2 + $0x80] sm:$0xff]
    %v40 = vld [vmem:[#allocation2 + $0x88] sm:$0xff]
    %v41 = vld [vmem:[#allocation2 + $0x90] sm:$0x7]
    %v42 = vadd.f32 %v23, %v24
    %v43 = vadd.f32 %v42, %v25
    %v44 = vadd.f32 %v43, %v26
    %v45 = vadd.f32 %v44, %v27
    %v46 = vadd.f32 %v45, %v28
    %v47 = vadd.f32 %v46, %v29
    %v48 = vadd.f32 %v47, %v30
    %v49 = vadd.f32 %v48, %v31
    %v50 = vadd.f32 %v49, %v32
    %v51 = vadd.f32 %v50, %v33
    %v52 = vadd.f32 %v51, %v34
    %v53 = vadd.f32 %v52, %v35
    %v54 = vadd.f32 %v53, %v36
    %v55 = vadd.f32 %v54, %v37
    %v56 = vadd.f32 %v55, %v38
    %v57 = vadd.f32 %v56, %v39
    %v58 = vadd.f32 %v57, %v40
    %vm59 = vcmask 1042432
    %v60 = vsel %vm59, %v41, 0.0
    %v61 = vadd.f32 %v58, %v60
    %v62 = vrot.slane %v61, 4
    %v63 = vadd.f32 %v61, %v62
    %v64 = vrot.slane %v63, 2
    %v65 = vadd.f32 %v63, %v64
    %v66 = vrot.slane %v65, 1
    %v67 = vadd.f32 %v65, %v66
    %v68 = vrcp.pop 147.0
    %v69 = vmul.f32 %v67, %v68
    %v70 = vsub.f32 %v23, %v69
    %v71 = vsub.f32 %v24, %v69
    %v72 = vsub.f32 %v25, %v69
    %v73 = vsub.f32 %v26, %v69
    %v74 = vsub.f32 %v27, %v69
    %v75 = vsub.f32 %v28, %v69
    %v76 = vsub.f32 %v29, %v69
    %v77 = vsub.f32 %v30, %v69
    %v78 = vsub.f32 %v31, %v69
    %v79 = vsub.f32 %v32, %v69
    %v80 = vsub.f32 %v33, %v69
    %v81 = vsub.f32 %v34, %v69
    %v82 = vsub.f32 %v35, %v69
    %v83 = vsub.f32 %v36, %v69
    %v84 = vsub.f32 %v37, %v69
    %v85 = vsub.f32 %v38, %v69
    %v86 = vsub.f32 %v39, %v69
    %v87 = vsub.f32 %v40, %v69
    %v88 = vsub.f32 %v41, %v69
    %v89 = vmul.f32 %v70, %v70
    %v90 = vmul.f32 %v71, %v71
    %v91 = vmul.f32 %v72, %v72
    %v92 = vmul.f32 %v73, %v73
    %v93 = vmul.f32 %v74, %v74
    %v94 = vmul.f32 %v75, %v75
    %v95 = vmul.f32 %v76, %v76
    %v96 = vmul.f32 %v77, %v77
    %v97 = vmul.f32 %v78, %v78
    %v98 = vmul.f32 %v79, %v79
    %v99 = vmul.f32 %v80, %v80
    %v100 = vmul.f32 %v81, %v81
    %v101 = vmul.f32 %v82, %v82
    %v102 = vmul.f32 %v83, %v83
    %v103 = vmul.f32 %v84, %v84
    %v104 = vmul.f32 %v85, %v85
    %v105 = vmul.f32 %v86, %v86
    %v106 = vmul.f32 %v87, %v87
    %v107 = vmul.f32 %v88, %v88
    %v108 = vadd.f32 %v89, %v90
    %v109 = vadd.f32 %v108, %v91
    %v110 = vadd.f32 %v109, %v92
    %v111 = vadd.f32 %v110, %v93
    %v112 = vadd.f32 %v111, %v94
    %v113 = vadd.f32 %v112, %v95
    %v114 = vadd.f32 %v113, %v96
    %v115 = vadd.f32 %v114, %v97
    %v116 = vadd.f32 %v115, %v98
    %v117 = vadd.f32 %v116, %v99
    %v118 = vadd.f32 %v117, %v100
    %v119 = vadd.f32 %v118, %v101
    %v120 = vadd.f32 %v119, %v102
    %v121 = vadd.f32 %v120, %v103
    %v122 = vadd.f32 %v121, %v104
    %v123 = vadd.f32 %v122, %v105
    %v124 = vadd.f32 %v123, %v106
    %v125 = vsel %vm59, %v107, 0.0
    %v126 = vadd.f32 %v124, %v125
    %v127 = vrot.slane %v126, 4
    %v128 = vadd.f32 %v126, %v127
    %v129 = vrot.slane %v128, 2
    %v130 = vadd.f32 %v128, %v129
    %v131 = vrot.slane %v130, 1
    %v132 = vadd.f32 %v130, %v131
    %v133 = vmul.f32 %v132, %v68
    %v134 = vadd.f32 %v133, 1e-05
    %v135 = vrsqrt.pop %v134
    %v136 = vmul.f32 %v70, %v135
    %v137 = vmul.f32 %v71, %v135
    %v138 = vmul.f32 %v72, %v135
    %v139 = vmul.f32 %v73, %v135
    %v140 = vmul.f32 %v74, %v135
    %v141 = vmul.f32 %v75, %v135
    %v142 = vmul.f32 %v76, %v135
    %v143 = vmul.f32 %v77, %v135
    %v144 = vmul.f32 %v78, %v135
    %v145 = vmul.f32 %v79, %v135
    %v146 = vmul.f32 %v80, %v135
    %v147 = vmul.f32 %v81, %v135
    %v148 = vmul.f32 %v82, %v135
    %v149 = vmul.f32 %v83, %v135
    %v150 = vmul.f32 %v84, %v135
    %v151 = vmul.f32 %v85, %v135
    %v152 = vmul.f32 %v86, %v135
    %v153 = vmul.f32 %v87, %v135
    %v154 = vmul.f32 %v88, %v135
    %v155 = vpack.c.bf16 %v137, %v136
    %v156 = vpack.c.bf16 %v139, %v138
    %v157 = vpack.c.bf16 %v141, %v140
    %v158 = vpack.c.bf16 %v143, %v142
    %v159 = vpack.c.bf16 %v145, %v144
    %v160 = vpack.c.bf16 %v147, %v146
    %v161 = vpack.c.bf16 %v149, %v148
    %v162 = vpack.c.bf16 %v151, %v150
    %v163 = vpack.c.bf16 %v153, %v152
    %v164 = vpack.c.bf16 %v154, %v154
    %v175 = vunpack.c.l.b16 %v155
    %v176 = vunpack.c.h.b16 %v155
    %v177 = vunpack.c.l.b16 %v156
    %v178 = vunpack.c.h.b16 %v156
    %v179 = vunpack.c.l.b16 %v157
    %v180 = vunpack.c.h.b16 %v157
    %v181 = vunpack.c.l.b16 %v158
    %v182 = vunpack.c.h.b16 %v158
    %v183 = vunpack.c.l.b16 %v159
    %v184 = vunpack.c.h.b16 %v159
    %v185 = vunpack.c.l.b16 %v160
    %v186 = vunpack.c.h.b16 %v160
    %v187 = vunpack.c.l.b16 %v161
    %v188 = vunpack.c.h.b16 %v161
    %v189 = vunpack.c.l.b16 %v162
    %v190 = vunpack.c.h.b16 %v162
    %v191 = vunpack.c.l.b16 %v163
    %v192 = vunpack.c.h.b16 %v163
    %v193 = vunpack.c.l.b16 %v164
    %v194 = vpack.c.b16 %v175, %v175
    %v195 = vpack.c.b16 %v176, %v176
    %v196 = vpack.c.b16 %v177, %v177
    %v197 = vpack.c.b16 %v178, %v178
    %v198 = vpack.c.b16 %v179, %v179
    %v199 = vpack.c.b16 %v180, %v180
    %v200 = vpack.c.b16 %v181, %v181
    %v201 = vpack.c.b16 %v182, %v182
    %v202 = vpack.c.b16 %v183, %v183
    %v203 = vpack.c.b16 %v184, %v184
    %v204 = vpack.c.b16 %v185, %v185
    %v205 = vpack.c.b16 %v186, %v186
    %v206 = vpack.c.b16 %v187, %v187
    %v207 = vpack.c.b16 %v188, %v188
    %v208 = vpack.c.b16 %v189, %v189
    %v209 = vpack.c.b16 %v190, %v190
    %v210 = vpack.c.b16 %v191, %v191
    %v211 = vpack.c.b16 %v192, %v192
    %v212 = vpack.c.b16 %v193, %v193
    %232 = vst [vmem:[#allocation5] sm:$0xf] %v194
    %233 = vst [vmem:[#allocation5 + $0x4] sm:$0xf] %v195
    %234 = vst [vmem:[#allocation5 + $0x8] sm:$0xf] %v196
    %235 = vst [vmem:[#allocation5 + $0xc] sm:$0xf] %v197
    %236 = vst [vmem:[#allocation5 + $0x10] sm:$0xf] %v198
    %237 = vst [vmem:[#allocation5 + $0x14] sm:$0xf] %v199
    %238 = vst [vmem:[#allocation5 + $0x18] sm:$0xf] %v200
    %239 = vst [vmem:[#allocation5 + $0x1c] sm:$0xf] %v201
    %240 = vst [vmem:[#allocation5 + $0x20] sm:$0xf] %v202
    %241 = vst [vmem:[#allocation5 + $0x24] sm:$0xf] %v203
    %242 = vst [vmem:[#allocation5 + $0x28] sm:$0xf] %v204
    %243 = vst [vmem:[#allocation5 + $0x2c] sm:$0xf] %v205
    %244 = vst [vmem:[#allocation5 + $0x30] sm:$0xf] %v206
    %245 = vst [vmem:[#allocation5 + $0x34] sm:$0xf] %v207
    %246 = vst [vmem:[#allocation5 + $0x38] sm:$0xf] %v208
    %247 = vst [vmem:[#allocation5 + $0x3c] sm:$0xf] %v209
    %248 = vst [vmem:[#allocation5 + $0x40] sm:$0xf] %v210
    %249 = vst [vmem:[#allocation5 + $0x44] sm:$0xf] %v211
    %vm250 = vcmask 1041408
    %vm251 = vsmask.f32 1280
    %vm252 = vmand %vm250, %vm251
    %v253 = vld [vmem:[#allocation5 + $0x48] sm:$0x3]
    %v254 = vsel %vm252, %v212, %v253
    %255 = vst [vmem:[#allocation5 + $0x48] sm:$0x3] %v254
    // Predicated region
    $region10: #{tpu_custom_call.1} parent=1 // pred_check
      _
    $region11: #{tpu_custom_call.1} parent=1 // pred_check_branch
      %257 = sbr.rel (0) target = $region13
    $region12: #{tpu_custom_call.1} parent=1 // pred_region
      %s259 = ssub.s32 1216, 1216
      %260 = vsyncadd [#allocation4], %s259
      %s261 = sshll.u32 [#allocation5], 4
      %s262 = int_to_ptr.vmem [resolvable:$true] %s261
      %267 = dma.vmem_to_hbm [thread:$0]  %s262, 1216, %s1, [#allocation4], 64, 64, 4
    $region13: #{tpu_custom_call.1} parent=1 // pred_fallthru
      _
    // Predicated region
    $region14: #{tpu_custom_call.1} parent=1 // pred_check
      _
    $region15: #{tpu_custom_call.1} parent=1 // pred_check_branch
      %269 = sbr.rel (0) target = $region17
    $region16: #{tpu_custom_call.1} parent=1 // pred_region
      %270 = dma.done [#allocation4], 1216
    $region17: #{tpu_custom_call.1} parent=1 // pred_fallthru
      _
    %271 = vsyncpa [#allocation3], 1
    %272 = vsyncpa [#allocation4], 1

</llo_original>
